<compile_context>
chip_gen: v7x
topology: tpu7x:2x2x1
jax: 0.10.0
libtpu: 0.0.40
codegen_flags: <defaults>
</compile_context>

<pallas_src>
import functools

import jax
import jax.numpy as jnp
from jax.experimental import pallas as pl
from jax.experimental.pallas import tpu as pltpu


def _vae_kernel(xT_ref, epsT_ref,
                w1_ref, w2_ref, wmv_ref, wd1_ref, wd2_ref, wd3_ref, b_ref,
                out_ref,
                *, input_dim, hidden_dim, latent_dim):
    H, H2, L = hidden_dim, 2 * hidden_dim, latent_dim

    # Static, 8-aligned sublane offsets into the packed bias column.
    # order: [b1 | b2 | bm | bv | bd1 | bd2 | bd3]
    o_b1 = 0
    o_b2 = o_b1 + H2
    o_bmv = o_b2 + H
    o_bd1 = o_bmv + 2 * L
    o_bd2 = o_bd1 + H
    o_bd3 = o_bd2 + H2

    bf16 = jnp.bfloat16
    f32 = jnp.float32

    def linear_t(w_ref, a, off, width):
        # (out, in) bf16 @ (in, TB) bf16 -> (out, TB) f32, bias column broadcast
        # over the lane (batch) axis.
        acc = jnp.dot(w_ref[...], a.astype(bf16), preferred_element_type=f32)
        return acc + b_ref[off:off + width, :]

    xT = xT_ref[...]  # already bf16, (input_dim, TB)

    # ---- encoder: Linear -> ReLU -> (Dropout=id) -> Linear -> ReLU -> (Dropout=id)
    h = jnp.maximum(linear_t(w1_ref, xT, o_b1, H2), 0.0)   # (H2, TB)
    h = jnp.maximum(linear_t(w2_ref, h, o_b2, H), 0.0)     # (H,  TB)

    # ---- fused latent heads: one matmul for [mean ; log_var], sublane split
    mv = linear_t(wmv_ref, h, o_bmv, 2 * L)                 # (2L, TB)
    mean = mv[:L, :]
    log_var = mv[L:, :]

    # ---- reparameterization: z = mean + eps * exp(0.5 * log_var)   (all f32)
    z = mean + epsT_ref[...] * jnp.exp(0.5 * log_var)       # (L, TB)

    # ---- decoder: Linear -> ReLU -> Linear -> ReLU -> Linear
    d = jnp.maximum(linear_t(wd1_ref, z, o_bd1, H), 0.0)    # (H,  TB)
    d = jnp.maximum(linear_t(wd2_ref, d, o_bd2, H2), 0.0)   # (H2, TB)
    x_recon = linear_t(wd3_ref, d, o_bd3, input_dim)        # (input_dim, TB)

    # ---- direct sublane-slice stores into the lane-dense output slab
    dt = out_ref.dtype
    out_ref[0:input_dim, :] = x_recon.astype(dt)
    out_ref[input_dim:input_dim + L, :] = mean.astype(dt)
    out_ref[input_dim + L:input_dim + 2 * L, :] = log_var.astype(dt)
    out_ref[input_dim + 2 * L:input_dim + 3 * L, :] = z.astype(dt)


def init_vae_params(key, input_dim, hidden_dim, latent_dim, dtype=jnp.float32):
    """Deterministic parameter init (Kaiming-uniform-like, as in nn.Linear)."""
    def linear(k, fan_in, fan_out):
        kw, kb = jax.random.split(k)
        bound = 1.0 / jnp.sqrt(fan_in)
        w = jax.random.uniform(kw, (fan_in, fan_out), dtype, -bound, bound)
        b = jax.random.uniform(kb, (1, fan_out), dtype, -bound, bound)
        return w, b

    ks = jax.random.split(key, 7)
    params = {}
    params["w1"], params["b1"] = linear(ks[0], input_dim, hidden_dim * 2)
    params["w2"], params["b2"] = linear(ks[1], hidden_dim * 2, hidden_dim)
    params["wm"], params["bm"] = linear(ks[2], hidden_dim, latent_dim)
    params["wv"], params["bv"] = linear(ks[3], hidden_dim, latent_dim)
    params["wd1"], params["bd1"] = linear(ks[4], latent_dim, hidden_dim)
    params["wd2"], params["bd2"] = linear(ks[5], hidden_dim, hidden_dim * 2)
    params["wd3"], params["bd3"] = linear(ks[6], hidden_dim * 2, input_dim)
    return params


@functools.partial(jax.jit, static_argnames=("block_rows",))
def vae_forward(x, eps, params, *, block_rows=128):
    B, input_dim = x.shape
    hidden_dim = params["w2"].shape[1]
    latent_dim = params["wm"].shape[1]
    L = latent_dim
    out_rows = input_dim + 3 * L

    # ---- pack / cast parameters: weights transposed to (out, in) bf16,
    #      biases packed into one 8-sublane-aligned f32 column.
    bf16 = jnp.bfloat16
    w1 = params["w1"].T.astype(bf16)
    w2 = params["w2"].T.astype(bf16)
    wmv = jnp.concatenate([params["wm"], params["wv"]], axis=1).T.astype(bf16)
    wd1 = params["wd1"].T.astype(bf16)
    wd2 = params["wd2"].T.astype(bf16)
    wd3 = params["wd3"].T.astype(bf16)
    biases = jnp.concatenate(
        [params["b1"], params["b2"], params["bm"], params["bv"],
         params["bd1"], params["bd2"], params["bd3"]], axis=1
    ).astype(jnp.float32).T                                  # (224, 1)

    # ---- feature-major activations: batch on the lane axis, bf16 x
    x_t = x.T.astype(bf16)                                   # (input_dim, B)
    eps_t = eps.T.astype(jnp.float32)                        # (L, B)

    # ---- batch (lane) tiling; pad batch to a multiple of the tile
    TB = block_rows
    n_blocks = -(-B // TB)
    B_pad = n_blocks * TB
    if B_pad != B:
        pad = B_pad - B
        x_t = jnp.pad(x_t, ((0, 0), (0, pad)))
        eps_t = jnp.pad(eps_t, ((0, 0), (0, pad)))

    kernel = functools.partial(_vae_kernel, input_dim=input_dim,
                               hidden_dim=hidden_dim, latent_dim=latent_dim)

    def col_spec(rows):
        # rows on sublanes, TB batch columns on lanes
        return pl.BlockSpec((rows, TB), lambda i: (0, i))

    def const_spec(arr):
        # weights / biases: full-array blocks, VMEM-resident across grid steps
        return pl.BlockSpec(arr.shape, lambda i: (0, 0))

    out = pl.pallas_call(
        kernel,
        out_shape=jax.ShapeDtypeStruct((out_rows, B_pad), x.dtype),
        grid=(n_blocks,),
        in_specs=[
            col_spec(input_dim),          # x_T   (tiled along lanes/batch)
            col_spec(latent_dim),         # eps_T (tiled along lanes/batch)
            const_spec(w1),
            const_spec(w2),
            const_spec(wmv),
            const_spec(wd1),
            const_spec(wd2),
            const_spec(wd3),
            const_spec(biases),
        ],
        out_specs=col_spec(out_rows),
        compiler_params=pltpu.CompilerParams(
            dimension_semantics=("parallel",)),
    )(x_t, eps_t, w1, w2, wmv, wd1, wd2, wd3, biases)

    out = out[:, :B]
    x_recon = out[:input_dim].T
    mean = out[input_dim:input_dim + L].T
    log_var = out[input_dim + L:input_dim + 2 * L].T
    z = out[input_dim + 2 * L:].T
    return x_recon, mean, log_var, z


def vae_forward_ref(x, eps, p):
    """Pure-JAX reference with matching bf16-matmul / f32-accumulate numerics."""
    bf = jnp.bfloat16

    def lin(a, w, b):
        return jnp.dot(a.astype(bf), w.astype(bf),
                       preferred_element_type=jnp.float32) + b

    h = jnp.maximum(lin(x, p["w1"], p["b1"]), 0.0)
    h = jnp.maximum(lin(h, p["w2"], p["b2"]), 0.0)
    mean = lin(h, p["wm"], p["bm"])
    log_var = lin(h, p["wv"], p["bv"])
    z = mean + eps * jnp.exp(0.5 * log_var)
    d = jnp.maximum(lin(z, p["wd1"], p["bd1"]), 0.0)
    d = jnp.maximum(lin(d, p["wd2"], p["bd2"]), 0.0)
    x_recon = lin(d, p["wd3"], p["bd3"])
    return x_recon, mean, log_var, z


if __name__ == "__main__":
    # (batch, input_dim) time-series feature rows; batch chosen to exercise the
    # lane-tiled grid (2 parallel steps of 128 batch columns -> both TCs on v7x).
    B, INPUT_DIM, HIDDEN_DIM, LATENT_DIM = 256, 16, 32, 8
    DROPOUT_RATE = 0.1  # identity at inference

    key = jax.random.PRNGKey(0)
    k_params, k_x, k_eps = jax.random.split(key, 3)

    params = init_vae_params(k_params, INPUT_DIM, HIDDEN_DIM, LATENT_DIM)
    x = jax.random.normal(k_x, (B, INPUT_DIM), dtype=jnp.float32)
    # eps for the reparameterization trick (torch.randn_like analogue), generated
    # in the wrapper so the kernel is deterministic given its inputs.
    eps = jax.random.normal(k_eps, (B, LATENT_DIM), dtype=jnp.float32)

    outs = jax.block_until_ready(vae_forward(x, eps, params))
    x_recon, mean, log_var, z = outs

    # Sanity check against the (numerics-matched) pure-JAX reference.
    refs = vae_forward_ref(x, eps, params)
    names = ("x_recon", "mean", "log_var", "z")
    for name, got, want in zip(names, outs, refs):
        assert got.shape == want.shape, (name, got.shape, want.shape)
        assert jnp.allclose(got, want, atol=5e-3, rtol=5e-3), (
            name, float(jnp.max(jnp.abs(got - want))))

    print("KERNEL_OK")
</pallas_src>

<mosaic_0001>
module attributes {stable_mosaic.version = 11 : i64} {
  func.func @_vae_kernel(%arg0: i32, %arg1: memref<16x128xbf16, #tpu.memory_space<vmem>>, %arg2: memref<8x128xf32, #tpu.memory_space<vmem>>, %arg3: memref<64x16xbf16, #tpu.memory_space<vmem>>, %arg4: memref<32x64xbf16, #tpu.memory_space<vmem>>, %arg5: memref<16x32xbf16, #tpu.memory_space<vmem>>, %arg6: memref<32x8xbf16, #tpu.memory_space<vmem>>, %arg7: memref<64x32xbf16, #tpu.memory_space<vmem>>, %arg8: memref<16x64xbf16, #tpu.memory_space<vmem>>, %arg9: memref<224x1xf32, #tpu.memory_space<vmem>>, %arg10: memref<40x128xf32, #tpu.memory_space<vmem>>) attributes {dimension_semantics = [#tpu.dimension_semantics<parallel>], iteration_bounds = array<i64: 2>, scalar_prefetch = 0 : i64, scratch_operands = 0 : i64, tpu.core_type = #tpu.core_type<tc>, window_params = [{transform_indices = @transform_0, window_bounds = array<i64: 16, 128>}, {transform_indices = @transform_1, window_bounds = array<i64: 8, 128>}, {pipeline_mode = #tpu.pipeline_mode<synchronous>, transform_indices = @transform_2, window_bounds = array<i64: 64, 16>}, {pipeline_mode = #tpu.pipeline_mode<synchronous>, transform_indices = @transform_3, window_bounds = array<i64: 32, 64>}, {pipeline_mode = #tpu.pipeline_mode<synchronous>, transform_indices = @transform_4, window_bounds = array<i64: 16, 32>}, {pipeline_mode = #tpu.pipeline_mode<synchronous>, transform_indices = @transform_5, window_bounds = array<i64: 32, 8>}, {pipeline_mode = #tpu.pipeline_mode<synchronous>, transform_indices = @transform_6, window_bounds = array<i64: 64, 32>}, {pipeline_mode = #tpu.pipeline_mode<synchronous>, transform_indices = @transform_7, window_bounds = array<i64: 16, 64>}, {pipeline_mode = #tpu.pipeline_mode<synchronous>, transform_indices = @transform_8, window_bounds = array<i64: 224, 1>}, {transform_indices = @transform_9, window_bounds = array<i64: 40, 128>}]} {
    %c0 = arith.constant 0 : index
    %c0_0 = arith.constant 0 : index
    %0 = vector.load %arg1[%c0, %c0_0] : memref<16x128xbf16, #tpu.memory_space<vmem>>, vector<16x128xbf16>
    %c0_1 = arith.constant 0 : index
    %c0_2 = arith.constant 0 : index
    %1 = vector.load %arg3[%c0_1, %c0_2] : memref<64x16xbf16, #tpu.memory_space<vmem>>, vector<64x16xbf16>
    %cst = arith.constant dense<0.000000e+00> : vector<64x128xf32>
    %2 = tpu.matmul %1, %0, %cst {dimension_numbers = #tpu.dot_dimension_numbers<[1], [0], [0], [1], [0, 0, 1, 1], [], []>} : vector<64x16xbf16>, vector<16x128xbf16>, vector<64x128xf32> -> vector<64x128xf32>
    %c0_3 = arith.constant 0 : index
    %c0_4 = arith.constant 0 : index
    %3 = vector.load %arg9[%c0_3, %c0_4] : memref<224x1xf32, #tpu.memory_space<vmem>>, vector<64x1xf32>
    %4 = vector.broadcast %3 : vector<64x1xf32> to vector<64x128xf32>
    %5 = arith.addf %2, %4 : vector<64x128xf32>
    %cst_5 = arith.constant 0.000000e+00 : f32
    %6 = vector.broadcast %cst_5 : f32 to vector<64x128xf32>
    %7 = arith.maximumf %5, %6 : vector<64x128xf32>
    %c0_6 = arith.constant 0 : index
    %c0_7 = arith.constant 0 : index
    %8 = vector.load %arg4[%c0_6, %c0_7] : memref<32x64xbf16, #tpu.memory_space<vmem>>, vector<32x64xbf16>
    %9 = arith.truncf %7 : vector<64x128xf32> to vector<64x128xbf16>
    %cst_8 = arith.constant dense<0.000000e+00> : vector<32x128xf32>
    %10 = tpu.matmul %8, %9, %cst_8 {dimension_numbers = #tpu.dot_dimension_numbers<[1], [0], [0], [1], [0, 0, 1, 1], [], []>} : vector<32x64xbf16>, vector<64x128xbf16>, vector<32x128xf32> -> vector<32x128xf32>
    %c64 = arith.constant 64 : index
    %c0_9 = arith.constant 0 : index
    %11 = vector.load %arg9[%c64, %c0_9] : memref<224x1xf32, #tpu.memory_space<vmem>>, vector<32x1xf32>
    %12 = vector.broadcast %11 : vector<32x1xf32> to vector<32x128xf32>
    %13 = arith.addf %10, %12 : vector<32x128xf32>
    %cst_10 = arith.constant 0.000000e+00 : f32
    %14 = vector.broadcast %cst_10 : f32 to vector<32x128xf32>
    %15 = arith.maximumf %13, %14 : vector<32x128xf32>
    %c0_11 = arith.constant 0 : index
    %c0_12 = arith.constant 0 : index
    %16 = vector.load %arg5[%c0_11, %c0_12] : memref<16x32xbf16, #tpu.memory_space<vmem>>, vector<16x32xbf16>
    %17 = arith.truncf %15 : vector<32x128xf32> to vector<32x128xbf16>
    %cst_13 = arith.constant dense<0.000000e+00> : vector<16x128xf32>
    %18 = tpu.matmul %16, %17, %cst_13 {dimension_numbers = #tpu.dot_dimension_numbers<[1], [0], [0], [1], [0, 0, 1, 1], [], []>} : vector<16x32xbf16>, vector<32x128xbf16>, vector<16x128xf32> -> vector<16x128xf32>
    %c96 = arith.constant 96 : index
    %c0_14 = arith.constant 0 : index
    %19 = vector.load %arg9[%c96, %c0_14] : memref<224x1xf32, #tpu.memory_space<vmem>>, vector<16x1xf32>
    %20 = vector.broadcast %19 : vector<16x1xf32> to vector<16x128xf32>
    %21 = arith.addf %18, %20 : vector<16x128xf32>
    %22 = vector.extract_strided_slice %21 {offsets = [0, 0], sizes = [8, 128], strides = [1, 1]} : vector<16x128xf32> to vector<8x128xf32>
    %23 = vector.extract_strided_slice %21 {offsets = [8, 0], sizes = [8, 128], strides = [1, 1]} : vector<16x128xf32> to vector<8x128xf32>
    %c0_15 = arith.constant 0 : index
    %c0_16 = arith.constant 0 : index
    %24 = vector.load %arg2[%c0_15, %c0_16] : memref<8x128xf32, #tpu.memory_space<vmem>>, vector<8x128xf32>
    %cst_17 = arith.constant 5.000000e-01 : f32
    %25 = vector.broadcast %cst_17 : f32 to vector<8x128xf32>
    %26 = arith.mulf %25, %23 : vector<8x128xf32>
    %27 = math.exp %26 : vector<8x128xf32>
    %28 = arith.mulf %24, %27 : vector<8x128xf32>
    %29 = arith.addf %22, %28 : vector<8x128xf32>
    %c0_18 = arith.constant 0 : index
    %c0_19 = arith.constant 0 : index
    %30 = vector.load %arg6[%c0_18, %c0_19] : memref<32x8xbf16, #tpu.memory_space<vmem>>, vector<32x8xbf16>
    %31 = arith.truncf %29 : vector<8x128xf32> to vector<8x128xbf16>
    %cst_20 = arith.constant dense<0.000000e+00> : vector<32x128xf32>
    %32 = tpu.matmul %30, %31, %cst_20 {dimension_numbers = #tpu.dot_dimension_numbers<[1], [0], [0], [1], [0, 0, 1, 1], [], []>} : vector<32x8xbf16>, vector<8x128xbf16>, vector<32x128xf32> -> vector<32x128xf32>
    %c112 = arith.constant 112 : index
    %c0_21 = arith.constant 0 : index
    %33 = vector.load %arg9[%c112, %c0_21] : memref<224x1xf32, #tpu.memory_space<vmem>>, vector<32x1xf32>
    %34 = vector.broadcast %33 : vector<32x1xf32> to vector<32x128xf32>
    %35 = arith.addf %32, %34 : vector<32x128xf32>
    %cst_22 = arith.constant 0.000000e+00 : f32
    %36 = vector.broadcast %cst_22 : f32 to vector<32x128xf32>
    %37 = arith.maximumf %35, %36 : vector<32x128xf32>
    %c0_23 = arith.constant 0 : index
    %c0_24 = arith.constant 0 : index
    %38 = vector.load %arg7[%c0_23, %c0_24] : memref<64x32xbf16, #tpu.memory_space<vmem>>, vector<64x32xbf16>
    %39 = arith.truncf %37 : vector<32x128xf32> to vector<32x128xbf16>
    %cst_25 = arith.constant dense<0.000000e+00> : vector<64x128xf32>
    %40 = tpu.matmul %38, %39, %cst_25 {dimension_numbers = #tpu.dot_dimension_numbers<[1], [0], [0], [1], [0, 0, 1, 1], [], []>} : vector<64x32xbf16>, vector<32x128xbf16>, vector<64x128xf32> -> vector<64x128xf32>
    %c144 = arith.constant 144 : index
    %c0_26 = arith.constant 0 : index
    %41 = vector.load %arg9[%c144, %c0_26] : memref<224x1xf32, #tpu.memory_space<vmem>>, vector<64x1xf32>
    %42 = vector.broadcast %41 : vector<64x1xf32> to vector<64x128xf32>
    %43 = arith.addf %40, %42 : vector<64x128xf32>
    %cst_27 = arith.constant 0.000000e+00 : f32
    %44 = vector.broadcast %cst_27 : f32 to vector<64x128xf32>
    %45 = arith.maximumf %43, %44 : vector<64x128xf32>
    %c0_28 = arith.constant 0 : index
    %c0_29 = arith.constant 0 : index
    %46 = vector.load %arg8[%c0_28, %c0_29] : memref<16x64xbf16, #tpu.memory_space<vmem>>, vector<16x64xbf16>
    %47 = arith.truncf %45 : vector<64x128xf32> to vector<64x128xbf16>
    %cst_30 = arith.constant dense<0.000000e+00> : vector<16x128xf32>
    %48 = tpu.matmul %46, %47, %cst_30 {dimension_numbers = #tpu.dot_dimension_numbers<[1], [0], [0], [1], [0, 0, 1, 1], [], []>} : vector<16x64xbf16>, vector<64x128xbf16>, vector<16x128xf32> -> vector<16x128xf32>
    %c208 = arith.constant 208 : index
    %c0_31 = arith.constant 0 : index
    %49 = vector.load %arg9[%c208, %c0_31] : memref<224x1xf32, #tpu.memory_space<vmem>>, vector<16x1xf32>
    %50 = vector.broadcast %49 : vector<16x1xf32> to vector<16x128xf32>
    %51 = arith.addf %48, %50 : vector<16x128xf32>
    %c0_32 = arith.constant 0 : index
    %c0_33 = arith.constant 0 : index
    %52 = vector.load %arg10[%c0_32, %c0_33] : memref<40x128xf32, #tpu.memory_space<vmem>>, vector<16x128xf32>
    tpu.vector_store %arg10[%c0_32, %c0_33], %51 {strides = array<i32>} : memref<40x128xf32, #tpu.memory_space<vmem>>, vector<16x128xf32>,
    %c16 = arith.constant 16 : index
    %c0_34 = arith.constant 0 : index
    %53 = vector.load %arg10[%c16, %c0_34] : memref<40x128xf32, #tpu.memory_space<vmem>>, vector<8x128xf32>
    tpu.vector_store %arg10[%c16, %c0_34], %22 {strides = array<i32>} : memref<40x128xf32, #tpu.memory_space<vmem>>, vector<8x128xf32>,
    %c24 = arith.constant 24 : index
    %c0_35 = arith.constant 0 : index
    %54 = vector.load %arg10[%c24, %c0_35] : memref<40x128xf32, #tpu.memory_space<vmem>>, vector<8x128xf32>
    tpu.vector_store %arg10[%c24, %c0_35], %23 {strides = array<i32>} : memref<40x128xf32, #tpu.memory_space<vmem>>, vector<8x128xf32>,
    %c32 = arith.constant 32 : index
    %c0_36 = arith.constant 0 : index
    %55 = vector.load %arg10[%c32, %c0_36] : memref<40x128xf32, #tpu.memory_space<vmem>>, vector<8x128xf32>
    tpu.vector_store %arg10[%c32, %c0_36], %29 {strides = array<i32>} : memref<40x128xf32, #tpu.memory_space<vmem>>, vector<8x128xf32>,
    return
  }
  func.func @transform_0(%arg0: i32) -> (i32, i32) {
    %c0_i32 = arith.constant 0 : i32
    %c0_i32_0 = arith.constant 0 : i32
    return %c0_i32, %arg0 : i32, i32
  }
  func.func @transform_1(%arg0: i32) -> (i32, i32) {
    %c0_i32 = arith.constant 0 : i32
    %c0_i32_0 = arith.constant 0 : i32
    return %c0_i32, %arg0 : i32, i32
  }
  func.func @transform_2(%arg0: i32) -> (i32, i32) {
    %c0_i32 = arith.constant 0 : i32
    %c0_i32_0 = arith.constant 0 : i32
    %c0_i32_1 = arith.constant 0 : i32
    return %c0_i32, %c0_i32_0 : i32, i32
  }
  func.func @transform_3(%arg0: i32) -> (i32, i32) {
    %c0_i32 = arith.constant 0 : i32
    %c0_i32_0 = arith.constant 0 : i32
    %c0_i32_1 = arith.constant 0 : i32
    return %c0_i32, %c0_i32_0 : i32, i32
  }
  func.func @transform_4(%arg0: i32) -> (i32, i32) {
    %c0_i32 = arith.constant 0 : i32
    %c0_i32_0 = arith.constant 0 : i32
    %c0_i32_1 = arith.constant 0 : i32
    return %c0_i32, %c0_i32_0 : i32, i32
  }
  func.func @transform_5(%arg0: i32) -> (i32, i32) {
    %c0_i32 = arith.constant 0 : i32
    %c0_i32_0 = arith.constant 0 : i32
    %c0_i32_1 = arith.constant 0 : i32
    return %c0_i32, %c0_i32_0 : i32, i32
  }
  func.func @transform_6(%arg0: i32) -> (i32, i32) {
    %c0_i32 = arith.constant 0 : i32
    %c0_i32_0 = arith.constant 0 : i32
    %c0_i32_1 = arith.constant 0 : i32
    return %c0_i32, %c0_i32_0 : i32, i32
  }
  func.func @transform_7(%arg0: i32) -> (i32, i32) {
    %c0_i32 = arith.constant 0 : i32
    %c0_i32_0 = arith.constant 0 : i32
    %c0_i32_1 = arith.constant 0 : i32
    return %c0_i32, %c0_i32_0 : i32, i32
  }
  func.func @transform_8(%arg0: i32) -> (i32, i32) {
    %c0_i32 = arith.constant 0 : i32
    %c0_i32_0 = arith.constant 0 : i32
    %c0_i32_1 = arith.constant 0 : i32
    return %c0_i32, %c0_i32_0 : i32, i32
  }
  func.func @transform_9(%arg0: i32) -> (i32, i32) {
    %c0_i32 = arith.constant 0 : i32
    %c0_i32_0 = arith.constant 0 : i32
    return %c0_i32, %arg0 : i32, i32
  }
}

</mosaic_0001>

<llo_original>
// kernel: vae_forward.1
$region0: #{vae_forward.1}
  #allocation0 [shape = 'u32[]', space=smem, size = 0x4, offset = 0x4, fixed_abs, tag = 'smem constant byte address 0x4 - core index']
  #allocation1 [shape = 'u32[144,128]{1,0:T(1,128)}', space=vmem, size = 0x12000, scoped, tag = 'internal scratch']
  %s0 = inlined_call_operand.vmem [shape: bf16[16,256], index: 0, kind: input, shape index: {}]
  %s1 = inlined_call_operand.vmem [shape: f32[8,256], index: 1, kind: input, shape index: {}]
  %s2 = inlined_call_operand.vmem [shape: bf16[64,16], index: 2, kind: input, shape index: {}]
  %s3 = inlined_call_operand.vmem [shape: bf16[32,64], index: 3, kind: input, shape index: {}]
  %s4 = inlined_call_operand.vmem [shape: bf16[16,32], index: 4, kind: input, shape index: {}]
  %s5 = inlined_call_operand.vmem [shape: bf16[32,8], index: 5, kind: input, shape index: {}]
  %s6 = inlined_call_operand.vmem [shape: bf16[64,32], index: 6, kind: input, shape index: {}]
  %s7 = inlined_call_operand.vmem [shape: bf16[16,64], index: 7, kind: input, shape index: {}]
  %s8 = inlined_call_operand.vmem [shape: f32[224,1], index: 8, kind: input, shape index: {}]
  %s9 = inlined_call_operand.vmem [shape: f32[40,256], index: 9, kind: output, shape index: {}]
  %s10 = sld [smem:[#allocation0]]
  $region144: #{vae_forward.1} parent=0
    _
  %s12 = ssub.s32 1, %s10
  %s13 = scalar_select 0, %s12, %s10
  $region1: #{vae_forward.1} parent=0
    #allocation2 [shape = 'u8[8192]{0}', space=vmem, size = 0x2000, scoped, tag = 'input window, operand 0']
    #allocation3 [shape = 'u8[40960]{0}', space=vmem, size = 0xa000, scoped, tag = 'output window, operand 0']
    loop: start=0, step=1, limit=4
    $region2: #{vae_forward.1} parent=1 // loop_pre_header
      _
    $region3: #{vae_forward.1} parent=1 // loop_header
      %s15 = sphi 0, %s19
      %p16 = scmp.ge.s32.totalorder %s15, 4
      %s25 = sphi 0, %s27
      %s28 = sphi 0, %s25
      %s29 = sphi 0, %s28
      %s45 = sphi 0, %s29
      %s51 = sphi 0, %s53
      %s54 = sphi 0, %s51
      %s55 = sphi 0, %s54
      %s71 = sphi 0, %s55
      %s75 = sphi 0, %s75
      %s77 = sphi 0, %s75
      %s78 = sphi 0, %s77
      %s92 = sphi 0, %s78
      %s96 = sphi 0, %s96
      %s98 = sphi 0, %s96
      %s99 = sphi 0, %s98
      %s113 = sphi 0, %s99
      %s117 = sphi 0, %s117
      %s119 = sphi 0, %s117
      %s120 = sphi 0, %s119
      %s134 = sphi 0, %s120
      %s138 = sphi 0, %s138
      %s140 = sphi 0, %s138
      %s141 = sphi 0, %s140
      %s155 = sphi 0, %s141
      %s159 = sphi 0, %s159
      %s161 = sphi 0, %s159
      %s162 = sphi 0, %s161
      %s176 = sphi 0, %s162
      %s180 = sphi 0, %s180
      %s182 = sphi 0, %s180
      %s183 = sphi 0, %s182
      %s197 = sphi 0, %s183
      %s201 = sphi 0, %s201
      %s203 = sphi 0, %s201
      %s204 = sphi 0, %s203
      %s218 = sphi 0, %s204
      %s224 = sphi 0, %s226
      %s227 = sphi 0, %s224
      %s228 = sphi 0, %s227
      %s244 = sphi 0, %s228
    $region4: #{vae_forward.1} parent=1 // loop_header_branch
      %18 = sbr.rel (%p16) target = $region8
    $region5: #{vae_forward.1} parent=1 // loop_body
      %s20 = ssub.s32 %s15, 1
      %s21 = ssub.s32 %s15, 2
      %s22 = sadd.s32 %s15, 1
      %s23 = ssub.s32 %s15, %s22
      %p24 = scmp.eq.s32.totalorder %s23, 0
      %s26 = sadd.s32 %s25, 1
      %s27 = scalar_select %p24, %s25, %s26
      %p30 = pneg %p24
      %p31 = scmp.eq.s32.totalorder %s15, 1
      %p32 = por %p30, %p31
      %p33 = scmp.ne.s32.totalorder %s25, %s28
      %p34 = scmp.eq.s32.totalorder %s15, 0
      %p35 = por %p33, %p34
      %p36 = scmp.ne.s32.totalorder %s25, %s28
      %p37 = scmp.eq.s32.totalorder %s20, 1
      %p38 = por %p36, %p37
      %p39 = scmp.ne.s32.totalorder %s28, %s29
      %p40 = scmp.eq.s32.totalorder %s20, 0
      %p41 = por %p39, %p40
      %p42 = scmp.ne.s32.totalorder %s28, %s29
      %p43 = scmp.eq.s32.totalorder %s21, 1
      %p44 = por %p42, %p43
      %p46 = scmp.ne.s32.totalorder %s29, %s45
      %p47 = scmp.eq.s32.totalorder %s21, 0
      %p48 = por %p46, %p47
      %s49 = ssub.s32 %s15, %s22
      %p50 = scmp.eq.s32.totalorder %s49, 0
      %s52 = sadd.s32 %s51, 1
      %s53 = scalar_select %p50, %s51, %s52
      %p56 = pneg %p50
      %p57 = scmp.eq.s32.totalorder %s15, 1
      %p58 = por %p56, %p57
      %p59 = scmp.ne.s32.totalorder %s51, %s54
      %p60 = scmp.eq.s32.totalorder %s15, 0
      %p61 = por %p59, %p60
      %p62 = scmp.ne.s32.totalorder %s51, %s54
      %p63 = scmp.eq.s32.totalorder %s20, 1
      %p64 = por %p62, %p63
      %p65 = scmp.ne.s32.totalorder %s54, %s55
      %p66 = scmp.eq.s32.totalorder %s20, 0
      %p67 = por %p65, %p66
      %p68 = scmp.ne.s32.totalorder %s54, %s55
      %p69 = scmp.eq.s32.totalorder %s21, 1
      %p70 = por %p68, %p69
      %p72 = scmp.ne.s32.totalorder %s55, %s71
      %p73 = scmp.eq.s32.totalorder %s21, 0
      %p74 = por %p72, %p73
      %s76 = sadd.s32 %s75, 1
      %p79 = scmp.eq.s32.totalorder %s15, 1
      %p80 = scmp.ne.s32.totalorder %s75, %s77
      %p81 = scmp.eq.s32.totalorder %s15, 0
      %p82 = por %p80, %p81
      %p83 = scmp.ne.s32.totalorder %s75, %s77
      %p84 = scmp.eq.s32.totalorder %s20, 1
      %p85 = por %p83, %p84
      %p86 = scmp.ne.s32.totalorder %s77, %s78
      %p87 = scmp.eq.s32.totalorder %s20, 0
      %p88 = por %p86, %p87
      %p89 = scmp.ne.s32.totalorder %s77, %s78
      %p90 = scmp.eq.s32.totalorder %s21, 1
      %p91 = por %p89, %p90
      %p93 = scmp.ne.s32.totalorder %s78, %s92
      %p94 = scmp.eq.s32.totalorder %s21, 0
      %p95 = por %p93, %p94
      %s97 = sadd.s32 %s96, 1
      %p100 = scmp.eq.s32.totalorder %s15, 1
      %p101 = scmp.ne.s32.totalorder %s96, %s98
      %p102 = scmp.eq.s32.totalorder %s15, 0
      %p103 = por %p101, %p102
      %p104 = scmp.ne.s32.totalorder %s96, %s98
      %p105 = scmp.eq.s32.totalorder %s20, 1
      %p106 = por %p104, %p105
      %p107 = scmp.ne.s32.totalorder %s98, %s99
      %p108 = scmp.eq.s32.totalorder %s20, 0
      %p109 = por %p107, %p108
      %p110 = scmp.ne.s32.totalorder %s98, %s99
      %p111 = scmp.eq.s32.totalorder %s21, 1
      %p112 = por %p110, %p111
      %p114 = scmp.ne.s32.totalorder %s99, %s113
      %p115 = scmp.eq.s32.totalorder %s21, 0
      %p116 = por %p114, %p115
      %s118 = sadd.s32 %s117, 1
      %p121 = scmp.eq.s32.totalorder %s15, 1
      %p122 = scmp.ne.s32.totalorder %s117, %s119
      %p123 = scmp.eq.s32.totalorder %s15, 0
      %p124 = por %p122, %p123
      %p125 = scmp.ne.s32.totalorder %s117, %s119
      %p126 = scmp.eq.s32.totalorder %s20, 1
      %p127 = por %p125, %p126
      %p128 = scmp.ne.s32.totalorder %s119, %s120
      %p129 = scmp.eq.s32.totalorder %s20, 0
      %p130 = por %p128, %p129
      %p131 = scmp.ne.s32.totalorder %s119, %s120
      %p132 = scmp.eq.s32.totalorder %s21, 1
      %p133 = por %p131, %p132
      %p135 = scmp.ne.s32.totalorder %s120, %s134
      %p136 = scmp.eq.s32.totalorder %s21, 0
      %p137 = por %p135, %p136
      %s139 = sadd.s32 %s138, 1
      %p142 = scmp.eq.s32.totalorder %s15, 1
      %p143 = scmp.ne.s32.totalorder %s138, %s140
      %p144 = scmp.eq.s32.totalorder %s15, 0
      %p145 = por %p143, %p144
      %p146 = scmp.ne.s32.totalorder %s138, %s140
      %p147 = scmp.eq.s32.totalorder %s20, 1
      %p148 = por %p146, %p147
      %p149 = scmp.ne.s32.totalorder %s140, %s141
      %p150 = scmp.eq.s32.totalorder %s20, 0
      %p151 = por %p149, %p150
      %p152 = scmp.ne.s32.totalorder %s140, %s141
      %p153 = scmp.eq.s32.totalorder %s21, 1
      %p154 = por %p152, %p153
      %p156 = scmp.ne.s32.totalorder %s141, %s155
      %p157 = scmp.eq.s32.totalorder %s21, 0
      %p158 = por %p156, %p157
      %s160 = sadd.s32 %s159, 1
      %p163 = scmp.eq.s32.totalorder %s15, 1
      %p164 = scmp.ne.s32.totalorder %s159, %s161
      %p165 = scmp.eq.s32.totalorder %s15, 0
      %p166 = por %p164, %p165
      %p167 = scmp.ne.s32.totalorder %s159, %s161
      %p168 = scmp.eq.s32.totalorder %s20, 1
      %p169 = por %p167, %p168
      %p170 = scmp.ne.s32.totalorder %s161, %s162
      %p171 = scmp.eq.s32.totalorder %s20, 0
      %p172 = por %p170, %p171
      %p173 = scmp.ne.s32.totalorder %s161, %s162
      %p174 = scmp.eq.s32.totalorder %s21, 1
      %p175 = por %p173, %p174
      %p177 = scmp.ne.s32.totalorder %s162, %s176
      %p178 = scmp.eq.s32.totalorder %s21, 0
      %p179 = por %p177, %p178
      %s181 = sadd.s32 %s180, 1
      %p184 = scmp.eq.s32.totalorder %s15, 1
      %p185 = scmp.ne.s32.totalorder %s180, %s182
      %p186 = scmp.eq.s32.totalorder %s15, 0
      %p187 = por %p185, %p186
      %p188 = scmp.ne.s32.totalorder %s180, %s182
      %p189 = scmp.eq.s32.totalorder %s20, 1
      %p190 = por %p188, %p189
      %p191 = scmp.ne.s32.totalorder %s182, %s183
      %p192 = scmp.eq.s32.totalorder %s20, 0
      %p193 = por %p191, %p192
      %p194 = scmp.ne.s32.totalorder %s182, %s183
      %p195 = scmp.eq.s32.totalorder %s21, 1
      %p196 = por %p194, %p195
      %p198 = scmp.ne.s32.totalorder %s183, %s197
      %p199 = scmp.eq.s32.totalorder %s21, 0
      %p200 = por %p198, %p199
      %s202 = sadd.s32 %s201, 1
      %p205 = scmp.eq.s32.totalorder %s15, 1
      %p206 = scmp.ne.s32.totalorder %s201, %s203
      %p207 = scmp.eq.s32.totalorder %s15, 0
      %p208 = por %p206, %p207
      %p209 = scmp.ne.s32.totalorder %s201, %s203
      %p210 = scmp.eq.s32.totalorder %s20, 1
      %p211 = por %p209, %p210
      %p212 = scmp.ne.s32.totalorder %s203, %s204
      %p213 = scmp.eq.s32.totalorder %s20, 0
      %p214 = por %p212, %p213
      %p215 = scmp.ne.s32.totalorder %s203, %s204
      %p216 = scmp.eq.s32.totalorder %s21, 1
      %p217 = por %p215, %p216
      %p219 = scmp.ne.s32.totalorder %s204, %s218
      %p220 = scmp.eq.s32.totalorder %s21, 0
      %p221 = por %p219, %p220
      %s222 = ssub.s32 %s15, %s22
      %p223 = scmp.eq.s32.totalorder %s222, 0
      %s225 = sadd.s32 %s224, 1
      %s226 = scalar_select %p223, %s224, %s225
      %p229 = pneg %p223
      %p230 = scmp.eq.s32.totalorder %s15, 1
      %p231 = por %p229, %p230
      %p232 = scmp.ne.s32.totalorder %s224, %s227
      %p233 = scmp.eq.s32.totalorder %s15, 0
      %p234 = por %p232, %p233
      %p235 = scmp.ne.s32.totalorder %s224, %s227
      %p236 = scmp.eq.s32.totalorder %s20, 1
      %p237 = por %p235, %p236
      %p238 = scmp.ne.s32.totalorder %s227, %s228
      %p239 = scmp.eq.s32.totalorder %s20, 0
      %p240 = por %p238, %p239
      %p241 = scmp.ne.s32.totalorder %s227, %s228
      %p242 = scmp.eq.s32.totalorder %s21, 1
      %p243 = por %p241, %p242
      %p245 = scmp.ne.s32.totalorder %s228, %s244
      %p246 = scmp.eq.s32.totalorder %s21, 0
      %p247 = por %p245, %p246
      %p248 = scmp.le.s32.totalorder 1, %s15
      %p249 = scmp.lt.s32.totalorder %s15, 3
      %p250 = pnand %p248, %p249
      %p251 = pneg %p250
      // Predicated region
      $region9: #{vae_forward.1} parent=5 // pred_check
        _
      $region10: #{vae_forward.1} parent=5 // pred_check_branch
        %253 = sbr.rel (%p250) target = $region12
      $region11: #{vae_forward.1} parent=5 // pred_region
        %s254 = ssub.s32 %s15, 1
        // Predicated region
        $region13: #{vae_forward.1} parent=11 // pred_check
          %p255 = pneg %p88
        $region14: #{vae_forward.1} parent=11 // pred_check_branch
          %257 = sbr.rel (%p255) target = $region16
        $region15: #{vae_forward.1} parent=11 // pred_region
          _
        $region16: #{vae_forward.1} parent=11 // pred_fallthru
          _
        // Predicated region
        $region17: #{vae_forward.1} parent=11 // pred_check
          %p258 = pneg %p109
        $region18: #{vae_forward.1} parent=11 // pred_check_branch
          %260 = sbr.rel (%p258) target = $region20
        $region19: #{vae_forward.1} parent=11 // pred_region
          _
        $region20: #{vae_forward.1} parent=11 // pred_fallthru
          _
        // Predicated region
        $region21: #{vae_forward.1} parent=11 // pred_check
          %p261 = pneg %p130
        $region22: #{vae_forward.1} parent=11 // pred_check_branch
          %263 = sbr.rel (%p261) target = $region24
        $region23: #{vae_forward.1} parent=11 // pred_region
          _
        $region24: #{vae_forward.1} parent=11 // pred_fallthru
          _
        // Predicated region
        $region25: #{vae_forward.1} parent=11 // pred_check
          %p264 = pneg %p151
        $region26: #{vae_forward.1} parent=11 // pred_check_branch
          %266 = sbr.rel (%p264) target = $region28
        $region27: #{vae_forward.1} parent=11 // pred_region
          _
        $region28: #{vae_forward.1} parent=11 // pred_fallthru
          _
        // Predicated region
        $region29: #{vae_forward.1} parent=11 // pred_check
          %p267 = pneg %p172
        $region30: #{vae_forward.1} parent=11 // pred_check_branch
          %269 = sbr.rel (%p267) target = $region32
        $region31: #{vae_forward.1} parent=11 // pred_region
          _
        $region32: #{vae_forward.1} parent=11 // pred_fallthru
          _
        // Predicated region
        $region33: #{vae_forward.1} parent=11 // pred_check
          %p270 = pneg %p193
        $region34: #{vae_forward.1} parent=11 // pred_check_branch
          %272 = sbr.rel (%p270) target = $region36
        $region35: #{vae_forward.1} parent=11 // pred_region
          _
        $region36: #{vae_forward.1} parent=11 // pred_fallthru
          _
        // Predicated region
        $region37: #{vae_forward.1} parent=11 // pred_check
          %p273 = pneg %p214
        $region38: #{vae_forward.1} parent=11 // pred_check_branch
          %275 = sbr.rel (%p273) target = $region40
        $region39: #{vae_forward.1} parent=11 // pred_region
          _
        $region40: #{vae_forward.1} parent=11 // pred_fallthru
          _
      $region12: #{vae_forward.1} parent=5 // pred_fallthru
        _
      %p276 = scmp.lt.s32.totalorder %s15, 2
      // Predicated region
      $region41: #{vae_forward.1} parent=5 // pred_check
        %p277 = pneg %p276
      $region42: #{vae_forward.1} parent=5 // pred_check_branch
        %279 = sbr.rel (%p277) target = $region44
      $region43: #{vae_forward.1} parent=5 // pred_region
        // Predicated region
        $region45: #{vae_forward.1} parent=43 // pred_check
          %p280 = pneg %p35
        $region46: #{vae_forward.1} parent=43 // pred_check_branch
          %282 = sbr.rel (%p280) target = $region48
        $region47: #{vae_forward.1} parent=43 // pred_region
          %s283 = sand.u32 %s25, 1
          %s284 = sand.u32 %s25, 1
          %s285 = smul.addr %s284, 8
          %s286 = scalar_lea.vmem [#allocation2], %s285
          %s287 = smul.addr %s15, 4
          %s288 = scalar_lea.vmem %s0, %s287
          // Predicated region
          $region49: #{vae_forward.1} parent=47 // pred_check
            _
          $region50: #{vae_forward.1} parent=47 // pred_check_branch
            %290 = sbr.rel (0) target = $region52
          $region51: #{vae_forward.1} parent=47 // pred_region
            // Predicated region
            $region53: #{vae_forward.1} parent=51 // pred_check
              _
            $region54: #{vae_forward.1} parent=51 // pred_check_branch
              %292 = sbr.rel target = $region56
            $region55: #{vae_forward.1} parent=51 // pred_region
              // Predicated region
              $region68: #{vae_forward.1} parent=55 // pred_check
                _
              $region69: #{vae_forward.1} parent=55 // pred_check_branch
                %309 = sbr.rel (0) target = $region71
              $region70: #{vae_forward.1} parent=55 // pred_region
                loop: start=0, step=1, limit=1
                $region72: #{vae_forward.1} parent=70 // loop_pre_header
                  _
                $region73: #{vae_forward.1} parent=70 // loop_header
                  %s311 = sphi 0, %s315
                  %p312 = scmp.ge.s32.totalorder %s311, 1
                  %s316 = sphi %s288, %s288
                  %s317 = sphi %s286, %s286
                $region74: #{vae_forward.1} parent=70 // loop_header_branch
                  %314 = sbr.rel (%p312) target = $region78
                $region75: #{vae_forward.1} parent=70 // loop_body
                  _
                $region76: #{vae_forward.1} parent=70 // loop_footer
                  %s315 = sadd.s32 1, %s311
                $region77: #{vae_forward.1} parent=70 // loop_footer_branch
                  %310 = sbr.rel target = $region73
                $region78: #{vae_forward.1} parent=70 // loop_exit
                  _
                loop: start=0, step=1, limit=1
                $region79: #{vae_forward.1} parent=70 // loop_pre_header
                  _
                $region80: #{vae_forward.1} parent=70 // loop_header
                  %s320 = sphi 0, %s324
                  %p321 = scmp.ge.s32.totalorder %s320, 1
                  %s325 = sphi %s288, %s288
                  %s326 = sphi %s286, %s286
                $region81: #{vae_forward.1} parent=70 // loop_header_branch
                  %323 = sbr.rel (%p321) target = $region85
                $region82: #{vae_forward.1} parent=70 // loop_body
                  %v327 = vld [vmem:[%s325] sm:$0xf]
                  %328 = vst [vmem:[%s326] sm:$0xf] %v327
                  %v329 = vld [vmem:[%s325 + $0x8] sm:$0xf]
                  %330 = vst [vmem:[%s326 + $0x4] sm:$0xf] %v329
                $region83: #{vae_forward.1} parent=70 // loop_footer
                  %s324 = sadd.s32 1, %s320
                $region84: #{vae_forward.1} parent=70 // loop_footer_branch
                  %319 = sbr.rel target = $region80
                $region85: #{vae_forward.1} parent=70 // loop_exit
                  _
              $region71: #{vae_forward.1} parent=55 // pred_fallthru
                _
            $region56: #{vae_forward.1} parent=51 // pred_fallthru
              _
            // Predicated region
            $region57: #{vae_forward.1} parent=51 // pred_check
              _
            $region58: #{vae_forward.1} parent=51 // pred_check_branch
              %294 = sbr.rel (0) target = $region60
            $region59: #{vae_forward.1} parent=51 // pred_region
              loop: start=0, step=1, limit=1
              $region61: #{vae_forward.1} parent=59 // loop_pre_header
                _
              $region62: #{vae_forward.1} parent=59 // loop_header
                %s297 = sphi 0, %s301
                %p298 = scmp.ge.s32.totalorder %s297, 1
                %s302 = sphi %s288, %s288
                %s303 = sphi %s286, %s286
              $region63: #{vae_forward.1} parent=59 // loop_header_branch
                %300 = sbr.rel (%p298) target = $region67
              $region64: #{vae_forward.1} parent=59 // loop_body
                %v304 = vld [vmem:[%s302] sm:$0xf]
                %305 = vst [vmem:[%s303] sm:$0xf] %v304
                %v306 = vld [vmem:[%s302 + $0x8] sm:$0xf]
                %307 = vst [vmem:[%s303 + $0x4] sm:$0xf] %v306
              $region65: #{vae_forward.1} parent=59 // loop_footer
                %s301 = sadd.s32 1, %s297
              $region66: #{vae_forward.1} parent=59 // loop_footer_branch
                %296 = sbr.rel target = $region62
              $region67: #{vae_forward.1} parent=59 // loop_exit
                _
            $region60: #{vae_forward.1} parent=51 // pred_fallthru
              _
          $region52: #{vae_forward.1} parent=47 // pred_fallthru
            _
          %331 = vnop
        $region48: #{vae_forward.1} parent=43 // pred_fallthru
          _
        // Predicated region
        $region86: #{vae_forward.1} parent=43 // pred_check
          %p332 = pneg %p61
        $region87: #{vae_forward.1} parent=43 // pred_check_branch
          %334 = sbr.rel (%p332) target = $region89
        $region88: #{vae_forward.1} parent=43 // pred_region
          %p335 = scmp.lt.s32.totalorder %s15, 1
          %s336 = scalar_select %p335, %s15, 1
          %s337 = smul.addr %s336, 8
          %s338 = scalar_lea.vmem %s1, %s337
        $region89: #{vae_forward.1} parent=43 // pred_fallthru
          _
      $region44: #{vae_forward.1} parent=5 // pred_fallthru
        _
      %p339 = scmp.le.s32.totalorder 1, %s15
      %p340 = scmp.lt.s32.totalorder %s15, 3
      %p341 = pnand %p339, %p340
      %p342 = pneg %p341
      // Predicated region
      $region90: #{vae_forward.1} parent=5 // pred_check
        _
      $region91: #{vae_forward.1} parent=5 // pred_check_branch
        %344 = sbr.rel (%p341) target = $region93
      $region92: #{vae_forward.1} parent=5 // pred_region
        %s345 = ssub.s32 %s15, 1
        %s346 = sand.u32 %s28, 1
        %s347 = sand.u32 %s28, 1
        %s348 = smul.addr %s347, 8
        %s349 = scalar_lea.vmem [#allocation2], %s348
        // Predicated region
        $region94: #{vae_forward.1} parent=92 // pred_check
          %p350 = pneg %p41
        $region95: #{vae_forward.1} parent=92 // pred_check_branch
          %352 = sbr.rel (%p350) target = $region97
        $region96: #{vae_forward.1} parent=92 // pred_region
          _
        $region97: #{vae_forward.1} parent=92 // pred_fallthru
          _
        %s353 = sand.u32 %s28, 1
        %s354 = sand.u32 %s28, 1
        %s355 = smul.addr %s354, 8
        %s356 = scalar_lea.vmem [#allocation2], %s355
        %p357 = pneg %p41
        %p358 = pneg %p38
        %p359 = scmp.lt.s32.totalorder %s20, 1
        %s360 = scalar_select %p359, %s20, 1
        %s361 = smul.addr %s360, 8
        %s362 = scalar_lea.vmem %s1, %s361
        %p363 = pneg %p67
        %p364 = pneg %p64
        %p365 = pneg %p88
        %p366 = pneg %p85
        %p367 = pneg %p109
        %p368 = pneg %p106
        %p369 = pneg %p130
        %p370 = pneg %p127
        %p371 = pneg %p151
        %p372 = pneg %p148
        %p373 = pneg %p172
        %p374 = pneg %p169
        %p375 = pneg %p193
        %p376 = pneg %p190
        %p377 = pneg %p214
        %p378 = pneg %p211
        %p379 = pneg %p240
        %p380 = pneg %p237
        %s381 = sand.u32 %s227, 1
        %s382 = sand.u32 %s227, 1
        %s383 = smul.addr %s382, 40
        %s384 = scalar_lea.vmem [#allocation3], %s383
        %p385 = scmp.lt.s32.totalorder %s20, 1
        %s386 = scalar_select %p385, %s20, 1
        %s387 = smul.addr %s386, 8
        %s388 = scalar_lea.vmem %s1, %s387
        %v390 = vld [vmem:[%s349] sm:$0xf]
        %v391 = vld [vmem:[%s349 + $0x4] sm:$0xf]
        %v392 = vld [vmem:[%s2] sm:$0xf]
        %v393 = vld [vmem:[%s2 + $0x4] sm:$0xf]
        %v394 = vld [vmem:[%s2 + $0x8] sm:$0xf]
        %v395 = vld [vmem:[%s2 + $0xc] sm:$0xf]
        %v396 = vld [vmem:[%s2 + $0x10] sm:$0xf]
        %v397 = vld [vmem:[%s2 + $0x14] sm:$0xf]
        %v398 = vld [vmem:[%s2 + $0x18] sm:$0xf]
        %v399 = vld [vmem:[%s2 + $0x1c] sm:$0xf]
        %v400 = vld [vmem:[%s8] sm:$0xff]
        %v401 = vld [vmem:[%s8 + $0x8] sm:$0xff]
        %v402 = vld [vmem:[%s8 + $0x10] sm:$0xff]
        %v403 = vld [vmem:[%s8 + $0x18] sm:$0xff]
        %v404 = vld [vmem:[%s8 + $0x20] sm:$0xff]
        %v405 = vld [vmem:[%s8 + $0x28] sm:$0xff]
        %v406 = vld [vmem:[%s8 + $0x30] sm:$0xff]
        %v407 = vld [vmem:[%s8 + $0x38] sm:$0xff]
        %409 = vset.pattern.permute.xlu0 0
        %410 = vperm.xlu0 %409, %v400
        %v411 = vpop.permute.xlu0 %410
        %414 = vset.pattern.permute.xlu0 0
        %415 = vperm.xlu0 %414, %v401
        %v416 = vpop.permute.xlu0 %415
        %419 = vset.pattern.permute.xlu0 0
        %420 = vperm.xlu0 %419, %v402
        %v421 = vpop.permute.xlu0 %420
        %424 = vset.pattern.permute.xlu0 0
        %425 = vperm.xlu0 %424, %v403
        %v426 = vpop.permute.xlu0 %425
        %429 = vset.pattern.permute.xlu0 0
        %430 = vperm.xlu0 %429, %v404
        %v431 = vpop.permute.xlu0 %430
        %434 = vset.pattern.permute.xlu0 0
        %435 = vperm.xlu0 %434, %v405
        %v436 = vpop.permute.xlu0 %435
        %439 = vset.pattern.permute.xlu0 0
        %440 = vperm.xlu0 %439, %v406
        %v441 = vpop.permute.xlu0 %440
        %444 = vset.pattern.permute.xlu0 0
        %445 = vperm.xlu0 %444, %v407
        %v446 = vpop.permute.xlu0 %445
        %v456 = vunpack.c.l.b16 %v392
        %v457 = vunpack.c.l.b16 %v393
        %v458 = vunpack.c.l.b16 %v394
        %v459 = vunpack.c.l.b16 %v395
        %v460 = vunpack.c.l.b16 %v396
        %v461 = vunpack.c.l.b16 %v397
        %v462 = vunpack.c.l.b16 %v398
        %v463 = vunpack.c.l.b16 %v399
        %v464 = vpack.c.b16 %v457, %v456
        %v465 = vpack.c.b16 %v459, %v458
        %v466 = vpack.c.b16 %v461, %v460
        %v467 = vpack.c.b16 %v463, %v462
        %v470 = vunpack.c.l.b16 %v390
        %v471 = vunpack.c.l.b16 %v391
        %v472 = vpack.c.b16 %v471, %v470
        %vm474 = vcmask 130048
        %v476 = vsel %vm474, %v464, 0
        %v479 = vsel %vm474, %v465, 0
        %v482 = vsel %vm474, %v466, 0
        %v485 = vsel %vm474, %v467, 0
        %487 = vmatprep.subr.bf16.mxu0 0
        %488 = vmatpush1.bf16.msra.mxu0 %v472
        %489 = vmatprep.subr.bf16.mxu0 0
        %490 = vmatpush1.bf16.msra.mxu0 0
        %491 = vmatprep.subr.bf16.mxu0 0
        %492 = vmatpush1.bf16.msra.mxu0 0
        %493 = vmatprep.subr.bf16.mxu0 0
        %494 = vmatpush1.bf16.msra.mxu0 0
        %495 = vmatprep.subr.bf16.mxu0 0
        %496 = vmatpush1.bf16.msra.mxu0 0
        %497 = vmatprep.subr.bf16.mxu0 0
        %498 = vmatpush1.bf16.msra.mxu0 0
        %499 = vmatprep.subr.bf16.mxu0 0
        %500 = vmatpush1.bf16.msra.mxu0 0
        %501 = vmatprep.subr.bf16.mxu0 0
        %502 = vmatpush1.bf16.msra.mxu0 0
        %503 = vmatprep.subr.bf16.mxu0 0
        %504 = vmatpush1.bf16.msra.mxu0 0
        %505 = vmatprep.subr.bf16.mxu0 0
        %506 = vmatpush1.bf16.msra.mxu0 0
        %507 = vmatprep.subr.bf16.mxu0 0
        %508 = vmatpush1.bf16.msra.mxu0 0
        %509 = vmatprep.subr.bf16.mxu0 0
        %510 = vmatpush1.bf16.msra.mxu0 0
        %511 = vmatprep.subr.bf16.mxu0 0
        %512 = vmatpush1.bf16.msra.mxu0 0
        %513 = vmatprep.subr.bf16.mxu0 0
        %514 = vmatpush1.bf16.msra.mxu0 0
        %515 = vmatprep.subr.bf16.mxu0 0
        %516 = vmatpush1.bf16.msra.mxu0 0
        %517 = vmatprep.subr.bf16.mxu0 0
        %518 = vmatpush1.bf16.msra.mxu0 0
        %519 = vmatprep.mubr.bf16.mxu0 0
        %520 = vmatmul.mubr.bf16.gmra.mrb[0].mxu0 %v476
        %v521 = vpop.f32.mrb[0].mxu0
        %v522 = vadd.f32 %v411, %v521
        %v523 = vpop.f32.mrb[0].mxu0
        %v524 = vpop.f32.mrb[0].mxu0
        %v525 = vadd.f32 %v416, %v524
        %v526 = vpop.f32.mrb[0].mxu0
        %527 = vmatprep.mubr.bf16.mxu0 0
        %528 = vmatmul.mubr.bf16.gmra.mrb[0].mxu0 %v479
        %v529 = vpop.f32.mrb[0].mxu0
        %v530 = vadd.f32 %v421, %v529
        %v531 = vpop.f32.mrb[0].mxu0
        %v532 = vpop.f32.mrb[0].mxu0
        %v533 = vadd.f32 %v426, %v532
        %v534 = vpop.f32.mrb[0].mxu0
        %535 = vmatprep.mubr.bf16.mxu0 0
        %536 = vmatmul.mubr.bf16.gmra.mrb[0].mxu0 %v482
        %v537 = vpop.f32.mrb[0].mxu0
        %v538 = vadd.f32 %v431, %v537
        %v539 = vpop.f32.mrb[0].mxu0
        %v540 = vpop.f32.mrb[0].mxu0
        %v541 = vadd.f32 %v436, %v540
        %v542 = vpop.f32.mrb[0].mxu0
        %543 = vmatprep.mubr.bf16.mxu0 0
        %544 = vmatmul.mubr.bf16.gmra.mrb[0].mxu0 %v485
        %v545 = vpop.f32.mrb[0].mxu0
        %v546 = vadd.f32 %v441, %v545
        %v547 = vpop.f32.mrb[0].mxu0
        %v548 = vpop.f32.mrb[0].mxu0
        %v549 = vadd.f32 %v446, %v548
        %v550 = vpop.f32.mrb[0].mxu0
        %551 = vdwg.mxu0
        %v552 = vmax.f32 %v522, 0.0
        %v553 = vmax.f32 %v525, 0.0
        %v554 = vmax.f32 %v530, 0.0
        %v555 = vmax.f32 %v533, 0.0
        %v556 = vmax.f32 %v538, 0.0
        %v557 = vmax.f32 %v541, 0.0
        %v558 = vmax.f32 %v546, 0.0
        %v559 = vmax.f32 %v549, 0.0
        %v560 = vld [vmem:[%s3] sm:$0xf]
        %v561 = vld [vmem:[%s3 + $0x4] sm:$0xf]
        %v562 = vld [vmem:[%s3 + $0x8] sm:$0xf]
        %v563 = vld [vmem:[%s3 + $0xc] sm:$0xf]
        %v564 = vpack.c.bf16 %v553, %v552
        %v565 = vpack.c.bf16 %v555, %v554
        %v566 = vpack.c.bf16 %v557, %v556
        %v567 = vpack.c.bf16 %v559, %v558
        %v568 = vld [vmem:[%s8 + $0x40] sm:$0xff]
        %v569 = vld [vmem:[%s8 + $0x48] sm:$0xff]
        %v570 = vld [vmem:[%s8 + $0x50] sm:$0xff]
        %v571 = vld [vmem:[%s8 + $0x58] sm:$0xff]
        %573 = vset.pattern.permute.xlu0 0
        %574 = vperm.xlu0 %573, %v568
        %v575 = vpop.permute.xlu0 %574
        %578 = vset.pattern.permute.xlu0 0
        %579 = vperm.xlu0 %578, %v569
        %v580 = vpop.permute.xlu0 %579
        %583 = vset.pattern.permute.xlu0 0
        %584 = vperm.xlu0 %583, %v570
        %v585 = vpop.permute.xlu0 %584
        %588 = vset.pattern.permute.xlu0 0
        %589 = vperm.xlu0 %588, %v571
        %v590 = vpop.permute.xlu0 %589
        %v596 = vunpack.c.l.b16 %v560
        %v597 = vunpack.c.l.b16 %v561
        %v598 = vunpack.c.l.b16 %v562
        %v599 = vunpack.c.l.b16 %v563
        %v600 = vpack.c.b16 %v597, %v596
        %v601 = vpack.c.b16 %v599, %v598
        %vm602 = vcmask 523264
        %v604 = vsel %vm602, %v600, 0
        %v607 = vsel %vm602, %v601, 0
        %609 = vmatprep.subr.bf16.mxu0 0
        %610 = vmatpush1.bf16.msra.mxu0 %v564
        %611 = vmatprep.subr.bf16.mxu0 0
        %612 = vmatpush1.bf16.msra.mxu0 %v565
        %613 = vmatprep.subr.bf16.mxu0 0
        %614 = vmatpush1.bf16.msra.mxu0 %v566
        %615 = vmatprep.subr.bf16.mxu0 0
        %616 = vmatpush1.bf16.msra.mxu0 %v567
        %617 = vmatprep.subr.bf16.mxu0 0
        %618 = vmatpush1.bf16.msra.mxu0 0
        %619 = vmatprep.subr.bf16.mxu0 0
        %620 = vmatpush1.bf16.msra.mxu0 0
        %621 = vmatprep.subr.bf16.mxu0 0
        %622 = vmatpush1.bf16.msra.mxu0 0
        %623 = vmatprep.subr.bf16.mxu0 0
        %624 = vmatpush1.bf16.msra.mxu0 0
        %625 = vmatprep.subr.bf16.mxu0 0
        %626 = vmatpush1.bf16.msra.mxu0 0
        %627 = vmatprep.subr.bf16.mxu0 0
        %628 = vmatpush1.bf16.msra.mxu0 0
        %629 = vmatprep.subr.bf16.mxu0 0
        %630 = vmatpush1.bf16.msra.mxu0 0
        %631 = vmatprep.subr.bf16.mxu0 0
        %632 = vmatpush1.bf16.msra.mxu0 0
        %633 = vmatprep.subr.bf16.mxu0 0
        %634 = vmatpush1.bf16.msra.mxu0 0
        %635 = vmatprep.subr.bf16.mxu0 0
        %636 = vmatpush1.bf16.msra.mxu0 0
        %637 = vmatprep.subr.bf16.mxu0 0
        %638 = vmatpush1.bf16.msra.mxu0 0
        %639 = vmatprep.subr.bf16.mxu0 0
        %640 = vmatpush1.bf16.msra.mxu0 0
        %641 = vmatprep.mubr.bf16.mxu0 0
        %642 = vmatmul.mubr.bf16.gmra.mrb[0].mxu0 %v604
        %v643 = vpop.f32.mrb[0].mxu0
        %v644 = vadd.f32 %v575, %v643
        %v645 = vpop.f32.mrb[0].mxu0
        %v646 = vpop.f32.mrb[0].mxu0
        %v647 = vadd.f32 %v580, %v646
        %v648 = vpop.f32.mrb[0].mxu0
        %649 = vmatprep.mubr.bf16.mxu0 0
        %650 = vmatmul.mubr.bf16.gmra.mrb[0].mxu0 %v607
        %v651 = vpop.f32.mrb[0].mxu0
        %v652 = vadd.f32 %v585, %v651
        %v653 = vpop.f32.mrb[0].mxu0
        %v654 = vpop.f32.mrb[0].mxu0
        %v655 = vadd.f32 %v590, %v654
        %v656 = vpop.f32.mrb[0].mxu0
        %657 = vdwg.mxu0
        %v658 = vmax.f32 %v644, 0.0
        %v659 = vmax.f32 %v647, 0.0
        %v660 = vmax.f32 %v652, 0.0
        %v661 = vmax.f32 %v655, 0.0
        %v662 = vld [vmem:[%s4] sm:$0xf]
        %v663 = vld [vmem:[%s4 + $0x4] sm:$0xf]
        %v664 = vpack.c.bf16 %v659, %v658
        %v665 = vpack.c.bf16 %v661, %v660
        %v666 = vld [vmem:[%s8 + $0x60] sm:$0xff]
        %v667 = vld [vmem:[%s8 + $0x68] sm:$0xff]
        %669 = vset.pattern.permute.xlu0 0
        %670 = vperm.xlu0 %669, %v666
        %v671 = vpop.permute.xlu0 %670
        %674 = vset.pattern.permute.xlu0 0
        %675 = vperm.xlu0 %674, %v667
        %v676 = vpop.permute.xlu0 %675
        %v680 = vunpack.c.l.b16 %v662
        %v681 = vunpack.c.l.b16 %v663
        %v682 = vpack.c.b16 %v681, %v680
        %vm683 = vcmask 261120
        %v685 = vsel %vm683, %v682, 0
        %687 = vmatprep.subr.bf16.mxu0 0
        %688 = vmatpush1.bf16.msra.mxu0 %v664
        %689 = vmatprep.subr.bf16.mxu0 0
        %690 = vmatpush1.bf16.msra.mxu0 %v665
        %691 = vmatprep.subr.bf16.mxu0 0
        %692 = vmatpush1.bf16.msra.mxu0 0
        %693 = vmatprep.subr.bf16.mxu0 0
        %694 = vmatpush1.bf16.msra.mxu0 0
        %695 = vmatprep.subr.bf16.mxu0 0
        %696 = vmatpush1.bf16.msra.mxu0 0
        %697 = vmatprep.subr.bf16.mxu0 0
        %698 = vmatpush1.bf16.msra.mxu0 0
        %699 = vmatprep.subr.bf16.mxu0 0
        %700 = vmatpush1.bf16.msra.mxu0 0
        %701 = vmatprep.subr.bf16.mxu0 0
        %702 = vmatpush1.bf16.msra.mxu0 0
        %703 = vmatprep.subr.bf16.mxu0 0
        %704 = vmatpush1.bf16.msra.mxu0 0
        %705 = vmatprep.subr.bf16.mxu0 0
        %706 = vmatpush1.bf16.msra.mxu0 0
        %707 = vmatprep.subr.bf16.mxu0 0
        %708 = vmatpush1.bf16.msra.mxu0 0
        %709 = vmatprep.subr.bf16.mxu0 0
        %710 = vmatpush1.bf16.msra.mxu0 0
        %711 = vmatprep.subr.bf16.mxu0 0
        %712 = vmatpush1.bf16.msra.mxu0 0
        %713 = vmatprep.subr.bf16.mxu0 0
        %714 = vmatpush1.bf16.msra.mxu0 0
        %715 = vmatprep.subr.bf16.mxu0 0
        %716 = vmatpush1.bf16.msra.mxu0 0
        %717 = vmatprep.subr.bf16.mxu0 0
        %718 = vmatpush1.bf16.msra.mxu0 0
        %719 = vmatprep.mubr.bf16.mxu0 0
        %720 = vmatmul.mubr.bf16.gmra.mrb[0].mxu0 %v685
        %v721 = vpop.f32.mrb[0].mxu0
        %v722 = vadd.f32 %v671, %v721
        %v723 = vpop.f32.mrb[0].mxu0
        %v724 = vpop.f32.mrb[0].mxu0
        %v725 = vadd.f32 %v676, %v724
        %v726 = vpop.f32.mrb[0].mxu0
        %727 = vdwg.mxu0
        %v728 = vld [vmem:[%s388] sm:$0xff]
        %v729 = vmul.f32 %v725, 0.5
        %v730 = vmul.f32 %v729, 1.442695
        %v731 = vpow.pop %v730
        %v732 = vmul.f32 %v728, %v731
        %v733 = vadd.f32 %v722, %v732
        %v734 = vld [vmem:[%s5] sm:$0xf]
        %v735 = vld [vmem:[%s5 + $0x4] sm:$0xf]
        %v736 = vld [vmem:[%s5 + $0x8] sm:$0xf]
        %v737 = vld [vmem:[%s5 + $0xc] sm:$0xf]
        %v738 = vpack.c.bf16 %v733, %v733
        %v739 = vld [vmem:[%s8 + $0x70] sm:$0xff]
        %v740 = vld [vmem:[%s8 + $0x78] sm:$0xff]
        %v741 = vld [vmem:[%s8 + $0x80] sm:$0xff]
        %v742 = vld [vmem:[%s8 + $0x88] sm:$0xff]
        %744 = vset.pattern.permute.xlu0 0
        %745 = vperm.xlu0 %744, %v739
        %v746 = vpop.permute.xlu0 %745
        %749 = vset.pattern.permute.xlu0 0
        %750 = vperm.xlu0 %749, %v740
        %v751 = vpop.permute.xlu0 %750
        %754 = vset.pattern.permute.xlu0 0
        %755 = vperm.xlu0 %754, %v741
        %v756 = vpop.permute.xlu0 %755
        %759 = vset.pattern.permute.xlu0 0
        %760 = vperm.xlu0 %759, %v742
        %v761 = vpop.permute.xlu0 %760
        %v767 = vunpack.c.l.b16 %v734
        %v768 = vunpack.c.l.b16 %v735
        %v769 = vunpack.c.l.b16 %v736
        %v770 = vunpack.c.l.b16 %v737
        %v771 = vpack.c.b16 %v768, %v767
        %v772 = vpack.c.b16 %v770, %v769
        %vm773 = vcmask 64512
        %v775 = vsel %vm773, %v771, 0
        %v778 = vsel %vm773, %v772, 0
        %vm780 = vcmask 1043456
        %v782 = vsel %vm780, %v738, 0
        %784 = vmatprep.subr.bf16.mxu0 0
        %785 = vmatpush1.bf16.msra.mxu0 %v782
        %786 = vmatprep.subr.bf16.mxu0 0
        %787 = vmatpush1.bf16.msra.mxu0 0
        %788 = vmatprep.subr.bf16.mxu0 0
        %789 = vmatpush1.bf16.msra.mxu0 0
        %790 = vmatprep.subr.bf16.mxu0 0
        %791 = vmatpush1.bf16.msra.mxu0 0
        %792 = vmatprep.subr.bf16.mxu0 0
        %793 = vmatpush1.bf16.msra.mxu0 0
        %794 = vmatprep.subr.bf16.mxu0 0
        %795 = vmatpush1.bf16.msra.mxu0 0
        %796 = vmatprep.subr.bf16.mxu0 0
        %797 = vmatpush1.bf16.msra.mxu0 0
        %798 = vmatprep.subr.bf16.mxu0 0
        %799 = vmatpush1.bf16.msra.mxu0 0
        %800 = vmatprep.subr.bf16.mxu0 0
        %801 = vmatpush1.bf16.msra.mxu0 0
        %802 = vmatprep.subr.bf16.mxu0 0
        %803 = vmatpush1.bf16.msra.mxu0 0
        %804 = vmatprep.subr.bf16.mxu0 0
        %805 = vmatpush1.bf16.msra.mxu0 0
        %806 = vmatprep.subr.bf16.mxu0 0
        %807 = vmatpush1.bf16.msra.mxu0 0
        %808 = vmatprep.subr.bf16.mxu0 0
        %809 = vmatpush1.bf16.msra.mxu0 0
        %810 = vmatprep.subr.bf16.mxu0 0
        %811 = vmatpush1.bf16.msra.mxu0 0
        %812 = vmatprep.subr.bf16.mxu0 0
        %813 = vmatpush1.bf16.msra.mxu0 0
        %814 = vmatprep.subr.bf16.mxu0 0
        %815 = vmatpush1.bf16.msra.mxu0 0
        %816 = vmatprep.mubr.bf16.mxu0 0
        %817 = vmatmul.mubr.bf16.gmra.mrb[0].mxu0 %v775
        %v818 = vpop.f32.mrb[0].mxu0
        %v819 = vadd.f32 %v746, %v818
        %v820 = vpop.f32.mrb[0].mxu0
        %v821 = vpop.f32.mrb[0].mxu0
        %v822 = vadd.f32 %v751, %v821
        %v823 = vpop.f32.mrb[0].mxu0
        %824 = vmatprep.mubr.bf16.mxu0 0
        %825 = vmatmul.mubr.bf16.gmra.mrb[0].mxu0 %v778
        %v826 = vpop.f32.mrb[0].mxu0
        %v827 = vadd.f32 %v756, %v826
        %v828 = vpop.f32.mrb[0].mxu0
        %v829 = vpop.f32.mrb[0].mxu0
        %v830 = vadd.f32 %v761, %v829
        %v831 = vpop.f32.mrb[0].mxu0
        %832 = vdwg.mxu0
        %v833 = vmax.f32 %v819, 0.0
        %v834 = vmax.f32 %v822, 0.0
        %v835 = vmax.f32 %v827, 0.0
        %v836 = vmax.f32 %v830, 0.0
        %v837 = vld [vmem:[%s6] sm:$0xf]
        %v838 = vld [vmem:[%s6 + $0x4] sm:$0xf]
        %v839 = vld [vmem:[%s6 + $0x8] sm:$0xf]
        %v840 = vld [vmem:[%s6 + $0xc] sm:$0xf]
        %v841 = vld [vmem:[%s6 + $0x10] sm:$0xf]
        %v842 = vld [vmem:[%s6 + $0x14] sm:$0xf]
        %v843 = vld [vmem:[%s6 + $0x18] sm:$0xf]
        %v844 = vld [vmem:[%s6 + $0x1c] sm:$0xf]
        %v845 = vpack.c.bf16 %v834, %v833
        %v846 = vpack.c.bf16 %v836, %v835
        %v847 = vld [vmem:[%s8 + $0x90] sm:$0xff]
        %v848 = vld [vmem:[%s8 + $0x98] sm:$0xff]
        %v849 = vld [vmem:[%s8 + $0xa0] sm:$0xff]
        %v850 = vld [vmem:[%s8 + $0xa8] sm:$0xff]
        %v851 = vld [vmem:[%s8 + $0xb0] sm:$0xff]
        %v852 = vld [vmem:[%s8 + $0xb8] sm:$0xff]
        %v853 = vld [vmem:[%s8 + $0xc0] sm:$0xff]
        %v854 = vld [vmem:[%s8 + $0xc8] sm:$0xff]
        %856 = vset.pattern.permute.xlu0 0
        %857 = vperm.xlu0 %856, %v847
        %v858 = vpop.permute.xlu0 %857
        %861 = vset.pattern.permute.xlu0 0
        %862 = vperm.xlu0 %861, %v848
        %v863 = vpop.permute.xlu0 %862
        %866 = vset.pattern.permute.xlu0 0
        %867 = vperm.xlu0 %866, %v849
        %v868 = vpop.permute.xlu0 %867
        %871 = vset.pattern.permute.xlu0 0
        %872 = vperm.xlu0 %871, %v850
        %v873 = vpop.permute.xlu0 %872
        %876 = vset.pattern.permute.xlu0 0
        %877 = vperm.xlu0 %876, %v851
        %v878 = vpop.permute.xlu0 %877
        %881 = vset.pattern.permute.xlu0 0
        %882 = vperm.xlu0 %881, %v852
        %v883 = vpop.permute.xlu0 %882
        %886 = vset.pattern.permute.xlu0 0
        %887 = vperm.xlu0 %886, %v853
        %v888 = vpop.permute.xlu0 %887
        %891 = vset.pattern.permute.xlu0 0
        %892 = vperm.xlu0 %891, %v854
        %v893 = vpop.permute.xlu0 %892
        %v903 = vunpack.c.l.b16 %v837
        %v904 = vunpack.c.l.b16 %v838
        %v905 = vunpack.c.l.b16 %v839
        %v906 = vunpack.c.l.b16 %v840
        %v907 = vunpack.c.l.b16 %v841
        %v908 = vunpack.c.l.b16 %v842
        %v909 = vunpack.c.l.b16 %v843
        %v910 = vunpack.c.l.b16 %v844
        %v911 = vpack.c.b16 %v904, %v903
        %v912 = vpack.c.b16 %v906, %v905
        %v913 = vpack.c.b16 %v908, %v907
        %v914 = vpack.c.b16 %v910, %v909
        %v916 = vsel %vm683, %v911, 0
        %v919 = vsel %vm683, %v912, 0
        %v922 = vsel %vm683, %v913, 0
        %v925 = vsel %vm683, %v914, 0
        %927 = vmatprep.subr.bf16.mxu0 0
        %928 = vmatpush1.bf16.msra.mxu0 %v845
        %929 = vmatprep.subr.bf16.mxu0 0
        %930 = vmatpush1.bf16.msra.mxu0 %v846
        %931 = vmatprep.subr.bf16.mxu0 0
        %932 = vmatpush1.bf16.msra.mxu0 0
        %933 = vmatprep.subr.bf16.mxu0 0
        %934 = vmatpush1.bf16.msra.mxu0 0
        %935 = vmatprep.subr.bf16.mxu0 0
        %936 = vmatpush1.bf16.msra.mxu0 0
        %937 = vmatprep.subr.bf16.mxu0 0
        %938 = vmatpush1.bf16.msra.mxu0 0
        %939 = vmatprep.subr.bf16.mxu0 0
        %940 = vmatpush1.bf16.msra.mxu0 0
        %941 = vmatprep.subr.bf16.mxu0 0
        %942 = vmatpush1.bf16.msra.mxu0 0
        %943 = vmatprep.subr.bf16.mxu0 0
        %944 = vmatpush1.bf16.msra.mxu0 0
        %945 = vmatprep.subr.bf16.mxu0 0
        %946 = vmatpush1.bf16.msra.mxu0 0
        %947 = vmatprep.subr.bf16.mxu0 0
        %948 = vmatpush1.bf16.msra.mxu0 0
        %949 = vmatprep.subr.bf16.mxu0 0
        %950 = vmatpush1.bf16.msra.mxu0 0
        %951 = vmatprep.subr.bf16.mxu0 0
        %952 = vmatpush1.bf16.msra.mxu0 0
        %953 = vmatprep.subr.bf16.mxu0 0
        %954 = vmatpush1.bf16.msra.mxu0 0
        %955 = vmatprep.subr.bf16.mxu0 0
        %956 = vmatpush1.bf16.msra.mxu0 0
        %957 = vmatprep.subr.bf16.mxu0 0
        %958 = vmatpush1.bf16.msra.mxu0 0
        %959 = vmatprep.mubr.bf16.mxu0 0
        %960 = vmatmul.mubr.bf16.gmra.mrb[0].mxu0 %v916
        %v961 = vpop.f32.mrb[0].mxu0
        %v962 = vadd.f32 %v858, %v961
        %v963 = vpop.f32.mrb[0].mxu0
        %v964 = vpop.f32.mrb[0].mxu0
        %v965 = vadd.f32 %v863, %v964
        %v966 = vpop.f32.mrb[0].mxu0
        %967 = vmatprep.mubr.bf16.mxu0 0
        %968 = vmatmul.mubr.bf16.gmra.mrb[0].mxu0 %v919
        %v969 = vpop.f32.mrb[0].mxu0
        %v970 = vadd.f32 %v868, %v969
        %v971 = vpop.f32.mrb[0].mxu0
        %v972 = vpop.f32.mrb[0].mxu0
        %v973 = vadd.f32 %v873, %v972
        %v974 = vpop.f32.mrb[0].mxu0
        %975 = vmatprep.mubr.bf16.mxu0 0
        %976 = vmatmul.mubr.bf16.gmra.mrb[0].mxu0 %v922
        %v977 = vpop.f32.mrb[0].mxu0
        %v978 = vadd.f32 %v878, %v977
        %v979 = vpop.f32.mrb[0].mxu0
        %v980 = vpop.f32.mrb[0].mxu0
        %v981 = vadd.f32 %v883, %v980
        %v982 = vpop.f32.mrb[0].mxu0
        %983 = vmatprep.mubr.bf16.mxu0 0
        %984 = vmatmul.mubr.bf16.gmra.mrb[0].mxu0 %v925
        %v985 = vpop.f32.mrb[0].mxu0
        %v986 = vadd.f32 %v888, %v985
        %v987 = vpop.f32.mrb[0].mxu0
        %v988 = vpop.f32.mrb[0].mxu0
        %v989 = vadd.f32 %v893, %v988
        %v990 = vpop.f32.mrb[0].mxu0
        %991 = vdwg.mxu0
        %v992 = vmax.f32 %v962, 0.0
        %v993 = vmax.f32 %v965, 0.0
        %v994 = vmax.f32 %v970, 0.0
        %v995 = vmax.f32 %v973, 0.0
        %v996 = vmax.f32 %v978, 0.0
        %v997 = vmax.f32 %v981, 0.0
        %v998 = vmax.f32 %v986, 0.0
        %v999 = vmax.f32 %v989, 0.0
        %v1000 = vld [vmem:[%s7] sm:$0xf]
        %v1001 = vld [vmem:[%s7 + $0x4] sm:$0xf]
        %v1002 = vpack.c.bf16 %v993, %v992
        %v1003 = vpack.c.bf16 %v995, %v994
        %v1004 = vpack.c.bf16 %v997, %v996
        %v1005 = vpack.c.bf16 %v999, %v998
        %v1006 = vld [vmem:[%s8 + $0xd0] sm:$0xff]
        %v1007 = vld [vmem:[%s8 + $0xd8] sm:$0xff]
        %1009 = vset.pattern.permute.xlu0 0
        %1010 = vperm.xlu0 %1009, %v1006
        %v1011 = vpop.permute.xlu0 %1010
        %1014 = vset.pattern.permute.xlu0 0
        %1015 = vperm.xlu0 %1014, %v1007
        %v1016 = vpop.permute.xlu0 %1015
        %v1020 = vunpack.c.l.b16 %v1000
        %v1021 = vunpack.c.l.b16 %v1001
        %v1022 = vpack.c.b16 %v1021, %v1020
        %v1024 = vsel %vm602, %v1022, 0
        %1026 = vmatprep.subr.bf16.mxu0 0
        %1027 = vmatpush1.bf16.msra.mxu0 %v1002
        %1028 = vmatprep.subr.bf16.mxu0 0
        %1029 = vmatpush1.bf16.msra.mxu0 %v1003
        %1030 = vmatprep.subr.bf16.mxu0 0
        %1031 = vmatpush1.bf16.msra.mxu0 %v1004
        %1032 = vmatprep.subr.bf16.mxu0 0
        %1033 = vmatpush1.bf16.msra.mxu0 %v1005
        %1034 = vmatprep.subr.bf16.mxu0 0
        %1035 = vmatpush1.bf16.msra.mxu0 0
        %1036 = vmatprep.subr.bf16.mxu0 0
        %1037 = vmatpush1.bf16.msra.mxu0 0
        %1038 = vmatprep.subr.bf16.mxu0 0
        %1039 = vmatpush1.bf16.msra.mxu0 0
        %1040 = vmatprep.subr.bf16.mxu0 0
        %1041 = vmatpush1.bf16.msra.mxu0 0
        %1042 = vmatprep.subr.bf16.mxu0 0
        %1043 = vmatpush1.bf16.msra.mxu0 0
        %1044 = vmatprep.subr.bf16.mxu0 0
        %1045 = vmatpush1.bf16.msra.mxu0 0
        %1046 = vmatprep.subr.bf16.mxu0 0
        %1047 = vmatpush1.bf16.msra.mxu0 0
        %1048 = vmatprep.subr.bf16.mxu0 0
        %1049 = vmatpush1.bf16.msra.mxu0 0
        %1050 = vmatprep.subr.bf16.mxu0 0
        %1051 = vmatpush1.bf16.msra.mxu0 0
        %1052 = vmatprep.subr.bf16.mxu0 0
        %1053 = vmatpush1.bf16.msra.mxu0 0
        %1054 = vmatprep.subr.bf16.mxu0 0
        %1055 = vmatpush1.bf16.msra.mxu0 0
        %1056 = vmatprep.subr.bf16.mxu0 0
        %1057 = vmatpush1.bf16.msra.mxu0 0
        %1058 = vmatprep.mubr.bf16.mxu0 0
        %1059 = vmatmul.mubr.bf16.gmra.mrb[0].mxu0 %v1024
        %v1060 = vpop.f32.mrb[0].mxu0
        %v1061 = vadd.f32 %v1011, %v1060
        %v1062 = vpop.f32.mrb[0].mxu0
        %v1063 = vpop.f32.mrb[0].mxu0
        %v1064 = vadd.f32 %v1016, %v1063
        %v1065 = vpop.f32.mrb[0].mxu0
        %1066 = vdwg.mxu0
        %1067 = vst [vmem:[%s384] sm:$0xff] %v1061
        %1068 = vst [vmem:[%s384 + $0x8] sm:$0xff] %v1064
        %1069 = vst [vmem:[%s384 + $0x10] sm:$0xff] %v722
        %1070 = vst [vmem:[%s384 + $0x18] sm:$0xff] %v725
        %1071 = vst [vmem:[%s384 + $0x20] sm:$0xff] %v733
        %s1072 = sand.u32 %s227, 1
        %s1073 = sand.u32 %s227, 1
        %s1074 = smul.addr %s1073, 40
        %s1075 = scalar_lea.vmem [#allocation3], %s1074
        // Predicated region
        $region98: #{vae_forward.1} parent=92 // pred_check
          %p1076 = pneg %p237
        $region99: #{vae_forward.1} parent=92 // pred_check_branch
          %1078 = sbr.rel (%p1076) target = $region101
        $region100: #{vae_forward.1} parent=92 // pred_region
          %s1079 = smul.addr %s20, 8
          %s1080 = scalar_lea.vmem %s9, %s1079
          // Predicated region
          $region102: #{vae_forward.1} parent=100 // pred_check
            _
          $region103: #{vae_forward.1} parent=100 // pred_check_branch
            %1082 = sbr.rel (0) target = $region105
          $region104: #{vae_forward.1} parent=100 // pred_region
            // Predicated region
            $region106: #{vae_forward.1} parent=104 // pred_check
              _
            $region107: #{vae_forward.1} parent=104 // pred_check_branch
              %1084 = sbr.rel (0) target = $region109
            $region108: #{vae_forward.1} parent=104 // pred_region
              // Predicated region
              $region121: #{vae_forward.1} parent=108 // pred_check
                _
              $region122: #{vae_forward.1} parent=108 // pred_check_branch
                %1107 = sbr.rel (0) target = $region124
              $region123: #{vae_forward.1} parent=108 // pred_region
                loop: start=0, step=1, limit=1
                $region125: #{vae_forward.1} parent=123 // loop_pre_header
                  _
                $region126: #{vae_forward.1} parent=123 // loop_header
                  %s1109 = sphi 0, %s1113
                  %p1110 = scmp.ge.s32.totalorder %s1109, 1
                  %s1114 = sphi %s1075, %s1075
                  %s1115 = sphi %s1080, %s1080
                $region127: #{vae_forward.1} parent=123 // loop_header_branch
                  %1112 = sbr.rel (%p1110) target = $region131
                $region128: #{vae_forward.1} parent=123 // loop_body
                  %v1116 = vld [vmem:[%s1114] sm:$0xff]
                  %1117 = vst [vmem:[%s1115] sm:$0xff] %v1116
                  %v1118 = vld [vmem:[%s1114 + $0x8] sm:$0xff]
                  %1119 = vst [vmem:[%s1115 + $0x10] sm:$0xff] %v1118
                  %v1120 = vld [vmem:[%s1114 + $0x10] sm:$0xff]
                  %1121 = vst [vmem:[%s1115 + $0x20] sm:$0xff] %v1120
                  %v1122 = vld [vmem:[%s1114 + $0x18] sm:$0xff]
                  %1123 = vst [vmem:[%s1115 + $0x30] sm:$0xff] %v1122
                  %v1124 = vld [vmem:[%s1114 + $0x20] sm:$0xff]
                  %1125 = vst [vmem:[%s1115 + $0x40] sm:$0xff] %v1124
                $region129: #{vae_forward.1} parent=123 // loop_footer
                  %s1113 = sadd.s32 1, %s1109
                $region130: #{vae_forward.1} parent=123 // loop_footer_branch
                  %1108 = sbr.rel target = $region126
                $region131: #{vae_forward.1} parent=123 // loop_exit
                  _
              $region124: #{vae_forward.1} parent=108 // pred_fallthru
                _
              // Predicated region
              $region132: #{vae_forward.1} parent=108 // pred_check
                _
              $region133: #{vae_forward.1} parent=108 // pred_check_branch
                %1127 = sbr.rel target = $region135
              $region134: #{vae_forward.1} parent=108 // pred_region
                _
              $region135: #{vae_forward.1} parent=108 // pred_fallthru
                _
            $region109: #{vae_forward.1} parent=104 // pred_fallthru
              _
            // Predicated region
            $region110: #{vae_forward.1} parent=104 // pred_check
              _
            $region111: #{vae_forward.1} parent=104 // pred_check_branch
              %1086 = sbr.rel target = $region113
            $region112: #{vae_forward.1} parent=104 // pred_region
              loop: start=0, step=1, limit=1
              $region114: #{vae_forward.1} parent=112 // loop_pre_header
                _
              $region115: #{vae_forward.1} parent=112 // loop_header
                %s1089 = sphi 0, %s1093
                %p1090 = scmp.ge.s32.totalorder %s1089, 1
                %s1094 = sphi %s1075, %s1075
                %s1095 = sphi %s1080, %s1080
              $region116: #{vae_forward.1} parent=112 // loop_header_branch
                %1092 = sbr.rel (%p1090) target = $region120
              $region117: #{vae_forward.1} parent=112 // loop_body
                %v1096 = vld [vmem:[%s1094] sm:$0xff]
                %1097 = vst [vmem:[%s1095] sm:$0xff] %v1096
                %v1098 = vld [vmem:[%s1094 + $0x8] sm:$0xff]
                %1099 = vst [vmem:[%s1095 + $0x10] sm:$0xff] %v1098
                %v1100 = vld [vmem:[%s1094 + $0x10] sm:$0xff]
                %1101 = vst [vmem:[%s1095 + $0x20] sm:$0xff] %v1100
                %v1102 = vld [vmem:[%s1094 + $0x18] sm:$0xff]
                %1103 = vst [vmem:[%s1095 + $0x30] sm:$0xff] %v1102
                %v1104 = vld [vmem:[%s1094 + $0x20] sm:$0xff]
                %1105 = vst [vmem:[%s1095 + $0x40] sm:$0xff] %v1104
              $region118: #{vae_forward.1} parent=112 // loop_footer
                %s1093 = sadd.s32 1, %s1089
              $region119: #{vae_forward.1} parent=112 // loop_footer_branch
                %1088 = sbr.rel target = $region115
              $region120: #{vae_forward.1} parent=112 // loop_exit
                _
            $region113: #{vae_forward.1} parent=104 // pred_fallthru
              _
          $region105: #{vae_forward.1} parent=100 // pred_fallthru
            _
          %1128 = vnop
        $region101: #{vae_forward.1} parent=92 // pred_fallthru
          _
      $region93: #{vae_forward.1} parent=5 // pred_fallthru
        _
      %p1129 = scmp.le.s32.totalorder 2, %s15
      // Predicated region
      $region136: #{vae_forward.1} parent=5 // pred_check
        %p1130 = pneg %p1129
      $region137: #{vae_forward.1} parent=5 // pred_check_branch
        %1132 = sbr.rel (%p1130) target = $region139
      $region138: #{vae_forward.1} parent=5 // pred_region
        %s1133 = ssub.s32 %s15, 2
        // Predicated region
        $region140: #{vae_forward.1} parent=138 // pred_check
          %p1134 = pneg %p243
        $region141: #{vae_forward.1} parent=138 // pred_check_branch
          %1136 = sbr.rel (%p1134) target = $region143
        $region142: #{vae_forward.1} parent=138 // pred_region
          %s1137 = sand.u32 %s228, 1
          %s1138 = sand.u32 %s228, 1
          %s1139 = smul.addr %s1138, 40
          %s1140 = scalar_lea.vmem [#allocation3], %s1139
        $region143: #{vae_forward.1} parent=138 // pred_fallthru
          _
      $region139: #{vae_forward.1} parent=5 // pred_fallthru
        _
    $region6: #{vae_forward.1} parent=1 // loop_footer
      %s19 = sadd.s32 1, %s15
    $region7: #{vae_forward.1} parent=1 // loop_footer_branch
      %14 = sbr.rel target = $region3
    $region8: #{vae_forward.1} parent=1 // loop_exit
      _

</llo_original>
